<compile_context>
chip_gen: v7x
topology: tpu7x:2x2x1
jax: 0.10.0
libtpu: 0.0.40
codegen_flags: <defaults>
</compile_context>

<pallas_src>
import functools

import jax
import jax.numpy as jnp
from jax.experimental import pallas as pl
from jax.experimental.pallas import tpu as pltpu

_LANE_COLS = 896                    # lcm(7, 128): width of the flat [M, 896] view
_DEFAULT_MAX_BLOCK_ROWS = 1024      # 1024 x 896 f32 = 3.5 MiB per operand per step
_HARD_MAX_BLOCK_ROWS = 2048         # keep 2 inputs x 2 buffers under ~29 MiB VMEM
_MIN_ROWS_FOR_PALLAS = 4096         # below this the fused XLA expression wins
_VMEM_LIMIT_BYTES = 32 * 1024 * 1024


def _round_up(x, m):
    return ((x + m - 1) // m) * m


def _num_tensorcores():
    """Best-effort detection of multi-TensorCore chips (v4 / v5p / v7x)."""
    try:
        kind = jax.devices()[0].device_kind.lower()
    except Exception:
        return 1
    if any(tag in kind for tag in ("v4", "v5p", "v7", "7x")):
        return 2
    return 1


def _beta_loss_kernel(w_ref, p_ref, t_ref, out_ref, acc_ref, *,
                      block_rows, total_rows, chunks_per_split, needs_mask):
    """One grid step: accumulate raw squared error for one [block_rows, 896] tile.

    w_ref   : [1, 896]           per-lane weights (1/(3N) or beta/(4N)), used at finalize
    p_ref   : [block_rows, 896]  predictions (flat view of the [N, 7] array)
    t_ref   : [block_rows, 896]  targets
    out_ref : [8, 128]           per-core-split partial loss (scalar splat)
    acc_ref : [1, 896]           per-lane running sum of d^2, resident across chunks
    """
    c = pl.program_id(0)          # core split (parallel)
    i = pl.program_id(1)          # chunk within split (arbitrary / reduction)

    @pl.when(i == 0)
    def _init():
        acc_ref[...] = jnp.zeros_like(acc_ref)

    d = p_ref[...] - t_ref[...]                 # VPU sub
    dd = d * d                                  # VPU mul
    if needs_mask:
        # Ragged final block: zero rows past the logical [M, 896] extent.
        row0 = (c * chunks_per_split + i) * block_rows
        rows = row0 + jax.lax.broadcasted_iota(jnp.int32, dd.shape, 0)
        dd = jnp.where(rows < total_rows, dd, 0.0)
    # Reduce this block's rows into the tiny resident accumulator (VALU adds).
    acc_ref[...] += jnp.sum(dd, axis=0, keepdims=True)

    @pl.when(i == pl.num_programs(1) - 1)
    def _finalize():
        # Weights (incl. beta and the 1/(3N), 1/(4N) divisors) applied exactly
        # once, then a single cross-lane reduce per core split.
        total = jnp.sum(acc_ref[...] * w_ref[...])
        out_ref[...] = jnp.full((8, 128), total, dtype=jnp.float32)


def beta_loss_ref(pred, targ, beta=512.0):
    """Pure-JAX reference matching torch.nn.MSELoss (mean reduction)."""
    mse_pos = jnp.mean((pred[:, :3] - targ[:, :3]) ** 2)
    mse_rot = jnp.mean((pred[:, 3:] - targ[:, 3:]) ** 2)
    return mse_pos + beta * mse_rot


def beta_loss(pred, targ, beta=512.0, *,
              max_block_rows=_DEFAULT_MAX_BLOCK_ROWS,
              min_rows_for_pallas=_MIN_ROWS_FOR_PALLAS):
    """Pallas implementation of BetaLoss.forward.  pred/targ: [N, 7]."""
    assert pred.shape == targ.shape
    n_rows, n_cols = pred.shape
    assert n_cols == 7, "BetaLoss expects N x 7 pose tensors"

    # Tiny inputs: launch + pipeline prologue dwarfs the handful of FLOPs.
    if n_rows < min_rows_for_pallas:
        return beta_loss_ref(pred.astype(jnp.float32),
                             targ.astype(jnp.float32), beta)

    pred = pred.astype(jnp.float32)
    targ = targ.astype(jnp.float32)

    # Flat lane-dense view [M, 896].  For N % 128 == 0 this is a free bitcast
    # (no extra HBM traffic); otherwise one contiguous flat zero-pad of BOTH
    # operands (pad rows give d = 0, so they contribute nothing).
    flat_p = pred.reshape(-1)
    flat_t = targ.reshape(-1)
    n_elems = 7 * n_rows
    m_rows = pl.cdiv(n_elems, _LANE_COLS)
    pad = m_rows * _LANE_COLS - n_elems
    if pad:
        flat_p = jnp.pad(flat_p, (0, pad))
        flat_t = jnp.pad(flat_t, (0, pad))
    p2 = flat_p.reshape(m_rows, _LANE_COLS)
    t2 = flat_t.reshape(m_rows, _LANE_COLS)

    # Per-lane weights: lane l holds pose component l % 7 (896 % 7 == 0).
    # Built with jnp ops so beta may be a traced value.
    comp = jnp.arange(_LANE_COLS, dtype=jnp.int32) % 7
    w = jnp.where(comp < 3,
                  jnp.float32(1.0) / (3.0 * n_rows),
                  jnp.asarray(beta, dtype=jnp.float32) / (4.0 * n_rows))
    w = w.astype(jnp.float32).reshape(1, _LANE_COLS)

    # Core split: only on multi-TensorCore chips and only when there is enough
    # data to shard; axis 0 is "parallel" (megacore sharding), axis 1 streams
    # chunks ("arbitrary" reduction axis, innermost).
    splits = _num_tensorcores()
    if m_rows < 16 * splits:
        splits = 1

    block_rows = max(8, min(_round_up(min(max_block_rows, _HARD_MAX_BLOCK_ROWS), 8),
                            _round_up(pl.cdiv(m_rows, splits), 8)))
    if block_rows > m_rows:          # single full-extent block
        block_rows = m_rows
        splits = 1
    chunks_per_split = pl.cdiv(m_rows, splits * block_rows)
    needs_mask = splits * chunks_per_split * block_rows != m_rows

    kernel = functools.partial(
        _beta_loss_kernel,
        block_rows=block_rows,
        total_rows=m_rows,
        chunks_per_split=chunks_per_split,
        needs_mask=needs_mask,
    )

    data_spec = pl.BlockSpec((block_rows, _LANE_COLS),
                             lambda c, i: (c * chunks_per_split + i, 0))
    grid_spec = pltpu.PrefetchScalarGridSpec(
        num_scalar_prefetch=0,
        grid=(splits, chunks_per_split),
        in_specs=[
            pl.BlockSpec((1, _LANE_COLS), lambda c, i: (0, 0)),   # weights, resident
            data_spec,                                            # pred block
            data_spec,                                            # targ block
        ],
        out_specs=pl.BlockSpec((8, 128), lambda c, i: (c, 0)),
        scratch_shapes=[pltpu.VMEM((1, _LANE_COLS), jnp.float32)],
    )

    cost = pl.CostEstimate(
        flops=3 * n_elems,                  # sub, mul, add per element
        transcendentals=0,
        bytes_accessed=2 * n_elems * 4 + splits * 8 * 128 * 4,
    )

    out = pl.pallas_call(
        kernel,
        out_shape=jax.ShapeDtypeStruct((splits * 8, 128), jnp.float32),
        grid_spec=grid_spec,
        compiler_params=pltpu.CompilerParams(
            dimension_semantics=("parallel", "arbitrary"),
            vmem_limit_bytes=_VMEM_LIMIT_BYTES,
        ),
        cost_estimate=cost,
    )(w, p2, t2)

    # One meaningful scalar per core split (at [c*8, 0]); sum the partials.
    return jnp.sum(out[::8, 0])


if __name__ == "__main__":
    key = jax.random.PRNGKey(0)
    beta = 512.0

    def check(n, **kw):
        k1, k2 = jax.random.split(jax.random.fold_in(key, n))
        pred = jax.random.normal(k1, (n, 7), dtype=jnp.float32)
        targ = jax.random.normal(k2, (n, 7), dtype=jnp.float32)
        got = jax.block_until_ready(beta_loss(pred, targ, beta=beta, **kw))
        want = beta_loss_ref(pred, targ, beta=beta)
        assert jnp.allclose(got, want, rtol=1e-4, atol=1e-4), (n, got, want)

    # Zero-copy path: N % 128 == 0 -> flat [M, 896] reshape is a pure bitcast.
    check(1024, min_rows_for_pallas=1)
    # Multi-chunk grid + ragged (masked) final block + resident accumulator.
    check(1152, min_rows_for_pallas=1, max_block_rows=8)
    # N % 128 != 0 -> flat zero-pad path.
    check(1000, min_rows_for_pallas=1)
    # Enough rows to engage the 2-TensorCore split on multi-core chips.
    check(4096, min_rows_for_pallas=1)
    # Tiny batch dispatches to the fused pure-JAX expression.
    check(8)

    print("KERNEL_OK")
</pallas_src>

<mosaic_0001>
module attributes {stable_mosaic.version = 11 : i64} {
  func.func @_beta_loss_kernel(%arg0: i32, %arg1: i32, %arg2: memref<1x896xf32, #tpu.memory_space<vmem>>, %arg3: memref<8x896xf32, #tpu.memory_space<vmem>>, %arg4: memref<8x896xf32, #tpu.memory_space<vmem>>, %arg5: memref<8x128xf32, #tpu.memory_space<vmem>>, %arg6: memref<1x896xf32, #tpu.memory_space<vmem>>) attributes {dimension_semantics = [#tpu.dimension_semantics<parallel>, #tpu.dimension_semantics<arbitrary>], iteration_bounds = array<i64: 1, 1>, scalar_prefetch = 0 : i64, scratch_operands = 1 : i64, tpu.core_type = #tpu.core_type<tc>, window_params = [{pipeline_mode = #tpu.pipeline_mode<synchronous>, transform_indices = @transform_0, window_bounds = array<i64: 1, 896>}, {transform_indices = @transform_1, window_bounds = array<i64: 8, 896>}, {transform_indices = @transform_2, window_bounds = array<i64: 8, 896>}, {transform_indices = @transform_3, window_bounds = array<i64: 8, 128>}]} {
    %c0_i32 = arith.constant 0 : i32
    %0 = arith.cmpi eq, %arg1, %c0_i32 : i32
    %1 = arith.extui %0 : i1 to i32
    %c0_i32_0 = arith.constant 0 : i32
    %2 = arith.cmpi ne, %1, %c0_i32_0 : i32
    scf.if %2 {
      %cst_10 = arith.constant 0.000000e+00 : f32
      %15 = vector.broadcast %cst_10 : f32 to vector<1x896xf32>
      %c0_11 = arith.constant 0 : index
      %c0_12 = arith.constant 0 : index
      %16 = vector.load %arg6[%c0_11, %c0_12] : memref<1x896xf32, #tpu.memory_space<vmem>>, vector<1x896xf32>
      tpu.vector_store %arg6[%c0_11, %c0_12], %15 {strides = array<i32>} : memref<1x896xf32, #tpu.memory_space<vmem>>, vector<1x896xf32>,
    } else {
    }
    %c0 = arith.constant 0 : index
    %c0_1 = arith.constant 0 : index
    %3 = vector.load %arg3[%c0, %c0_1] : memref<8x896xf32, #tpu.memory_space<vmem>>, vector<8x896xf32>
    %c0_2 = arith.constant 0 : index
    %c0_3 = arith.constant 0 : index
    %4 = vector.load %arg4[%c0_2, %c0_3] : memref<8x896xf32, #tpu.memory_space<vmem>>, vector<8x896xf32>
    %5 = arith.subf %3, %4 : vector<8x896xf32>
    %6 = arith.mulf %5, %5 : vector<8x896xf32>
    %c0_4 = arith.constant 0 : index
    %c0_5 = arith.constant 0 : index
    %7 = vector.load %arg6[%c0_4, %c0_5] : memref<1x896xf32, #tpu.memory_space<vmem>>, vector<1x896xf32>
    %cst = arith.constant dense<0.000000e+00> : vector<896xf32>
    %8 = vector.multi_reduction <add>, %6, %cst [0] : vector<8x896xf32> to vector<896xf32>
    %9 = vector.shape_cast %8 : vector<896xf32> to vector<1x896xf32>
    %10 = arith.addf %7, %9 : vector<1x896xf32>
    %c0_6 = arith.constant 0 : index
    %c0_7 = arith.constant 0 : index
    %11 = vector.load %arg6[%c0_6, %c0_7] : memref<1x896xf32, #tpu.memory_space<vmem>>, vector<1x896xf32>
    tpu.vector_store %arg6[%c0_6, %c0_7], %10 {strides = array<i32>} : memref<1x896xf32, #tpu.memory_space<vmem>>, vector<1x896xf32>,
    %c0_i32_8 = arith.constant 0 : i32
    %12 = arith.cmpi eq, %arg1, %c0_i32_8 : i32
    %13 = arith.extui %12 : i1 to i32
    %c0_i32_9 = arith.constant 0 : i32
    %14 = arith.cmpi ne, %13, %c0_i32_9 : i32
    scf.if %14 {
      %c0_10 = arith.constant 0 : index
      %c0_11 = arith.constant 0 : index
      %15 = vector.load %arg6[%c0_10, %c0_11] : memref<1x896xf32, #tpu.memory_space<vmem>>, vector<1x896xf32>
      %c0_12 = arith.constant 0 : index
      %c0_13 = arith.constant 0 : index
      %16 = vector.load %arg2[%c0_12, %c0_13] : memref<1x896xf32, #tpu.memory_space<vmem>>, vector<1x896xf32>
      %17 = arith.mulf %15, %16 : vector<1x896xf32>
      %18 = vector.shape_cast %17 : vector<1x896xf32> to vector<1x1x896xf32>
      %cst_14 = arith.constant dense<0.000000e+00> : vector<1xf32>
      %19 = vector.multi_reduction <add>, %18, %cst_14 [1, 2] : vector<1x1x896xf32> to vector<1xf32>
      %20 = vector.shape_cast %19 : vector<1xf32> to vector<1x1x1xf32>
      %21 = vector.extract %20[0, 0, 0] : f32 from vector<1x1x1xf32>
      %22 = vector.broadcast %21 : f32 to vector<8x128xf32>
      %c0_15 = arith.constant 0 : index
      %c0_16 = arith.constant 0 : index
      %23 = vector.load %arg5[%c0_15, %c0_16] : memref<8x128xf32, #tpu.memory_space<vmem>>, vector<8x128xf32>
      tpu.vector_store %arg5[%c0_15, %c0_16], %22 {strides = array<i32>} : memref<8x128xf32, #tpu.memory_space<vmem>>, vector<8x128xf32>,
    } else {
    }
    return
  }
  func.func @transform_0(%arg0: i32, %arg1: i32) -> (i32, i32) {
    %c0_i32 = arith.constant 0 : i32
    %c0_i32_0 = arith.constant 0 : i32
    %c0_i32_1 = arith.constant 0 : i32
    return %c0_i32, %c0_i32_0 : i32, i32
  }
  func.func @transform_1(%arg0: i32, %arg1: i32) -> (i32, i32) {
    %c1_i32 = arith.constant 1 : i32
    %0 = arith.muli %arg0, %c1_i32 : i32
    %1 = arith.addi %0, %arg1 : i32
    %c0_i32 = arith.constant 0 : i32
    %c0_i32_0 = arith.constant 0 : i32
    return %1, %c0_i32 : i32, i32
  }
  func.func @transform_2(%arg0: i32, %arg1: i32) -> (i32, i32) {
    %c1_i32 = arith.constant 1 : i32
    %0 = arith.muli %arg0, %c1_i32 : i32
    %1 = arith.addi %0, %arg1 : i32
    %c0_i32 = arith.constant 0 : i32
    %c0_i32_0 = arith.constant 0 : i32
    return %1, %c0_i32 : i32, i32
  }
  func.func @transform_3(%arg0: i32, %arg1: i32) -> (i32, i32) {
    %c0_i32 = arith.constant 0 : i32
    %c0_i32_0 = arith.constant 0 : i32
    return %arg0, %c0_i32 : i32, i32
  }
}

</mosaic_0001>

<llo_original>
// kernel: tpu_custom_call.1
$region0: #{tpu_custom_call.1}
  #allocation0 [shape = 'u32[]', space=smem, size = 0x4, offset = 0x4, fixed_abs, tag = 'smem constant byte address 0x4 - core index']
  #allocation1 [shape = 'u32[144,128]{1,0:T(1,128)}', space=vmem, size = 0x12000, scoped, tag = 'internal scratch']
  #allocation2 [shape = 'f32[1,896]{1,0:T(1,128)}', space=vmem, size = 0xe00, scoped, tag = 'scratch operand']
  %s0 = inlined_call_operand.hbm [shape: f32[1,896], index: 0, kind: input, shape index: {}]
  %s1 = inlined_call_operand.hbm [shape: f32[8,896], index: 1, kind: input, shape index: {}]
  %s2 = inlined_call_operand.hbm [shape: f32[8,896], index: 2, kind: input, shape index: {}]
  %s3 = inlined_call_operand.hbm [shape: f32[8,128], index: 3, kind: output, shape index: {}]
  %s4 = sld [smem:[#allocation0]]
  $region42: #{tpu_custom_call.1} parent=0
    _
  %s6 = ssub.s32 1, %s4
  %s7 = scalar_select 0, %s6, %s4
  $region1: #{tpu_custom_call.1} parent=0
    #allocation3 [shape = 'u8[3584]{0}', space=vmem, size = 0x1000, scoped, tag = 'input window, operand 0, single buffered']
    #allocation4 [shape = 's32[1]{0}', space=sflag, size = 0x4, scoped, tag = 'scoped memory for tpu_custom_call.1']
    #allocation5 [shape = 's32[1]{0}', space=sflag, size = 0x4, scoped, tag = 'scoped memory for tpu_custom_call.1']
    #allocation6 [shape = 'u8[28672]{0}', space=vmem, size = 0x7000, scoped, tag = 'input window, operand 1, single buffered']
    #allocation7 [shape = 's32[1]{0}', space=sflag, size = 0x4, scoped, tag = 'scoped memory for tpu_custom_call.1']
    #allocation8 [shape = 'u8[28672]{0}', space=vmem, size = 0x7000, scoped, tag = 'input window, operand 2, single buffered']
    #allocation9 [shape = 'u8[4096]{0}', space=vmem, size = 0x1000, scoped, tag = 'output window, operand 0, single buffered']
    %8 = vsyncpa [#allocation4], 0
    %9 = vsyncpa [#allocation7], 0
    %10 = vsyncpa [#allocation5], 0
    // Predicated region
    $region2: #{tpu_custom_call.1} parent=1 // pred_check
      _
    $region3: #{tpu_custom_call.1} parent=1 // pred_check_branch
      %12 = sbr.rel (0) target = $region5
    $region4: #{tpu_custom_call.1} parent=1 // pred_region
      %s14 = ssub.s32 112, 112
      %15 = vsyncadd [#allocation4], %s14
      %s17 = sshll.u32 [#allocation3], 4
      %s18 = int_to_ptr.vmem [resolvable:$true] %s17
      %20 = dma.hbm_to_vmem [thread:$0]  %s0, 112, %s18, [#allocation4]
    $region5: #{tpu_custom_call.1} parent=1 // pred_fallthru
      _
    // Predicated region
    $region6: #{tpu_custom_call.1} parent=1 // pred_check
      _
    $region7: #{tpu_custom_call.1} parent=1 // pred_check_branch
      %22 = sbr.rel (0) target = $region9
    $region8: #{tpu_custom_call.1} parent=1 // pred_region
      %s23 = sadd.s32 0, 0
      %s25 = ssub.s32 896, 896
      %26 = vsyncadd [#allocation7], %s25
      %s27 = smul.addr %s23, 7
      %s28 = smul.addr %s27, 128
      %s29 = scalar_lea.hbm %s1, %s28
      %s31 = sshll.u32 [#allocation6], 4
      %s32 = int_to_ptr.vmem [resolvable:$true] %s31
      %34 = dma.hbm_to_vmem [thread:$0]  %s29, 896, %s32, [#allocation7]
    $region9: #{tpu_custom_call.1} parent=1 // pred_fallthru
      _
    // Predicated region
    $region10: #{tpu_custom_call.1} parent=1 // pred_check
      _
    $region11: #{tpu_custom_call.1} parent=1 // pred_check_branch
      %36 = sbr.rel (0) target = $region13
    $region12: #{tpu_custom_call.1} parent=1 // pred_region
      %s37 = sadd.s32 0, 0
      %s39 = ssub.s32 896, 896
      %40 = vsyncadd [#allocation7], %s39
      %s41 = smul.addr %s37, 7
      %s42 = smul.addr %s41, 128
      %s43 = scalar_lea.hbm %s2, %s42
      %s45 = sshll.u32 [#allocation8], 4
      %s46 = int_to_ptr.vmem [resolvable:$true] %s45
      %48 = dma.hbm_to_vmem [thread:$0]  %s43, 896, %s46, [#allocation7]
    $region13: #{tpu_custom_call.1} parent=1 // pred_fallthru
      _
    // Predicated region
    $region14: #{tpu_custom_call.1} parent=1 // pred_check
      _
    $region15: #{tpu_custom_call.1} parent=1 // pred_check_branch
      %50 = sbr.rel (0) target = $region17
    $region16: #{tpu_custom_call.1} parent=1 // pred_region
      %51 = dma.done [#allocation4], 112
    $region17: #{tpu_custom_call.1} parent=1 // pred_fallthru
      _
    // Predicated region
    $region18: #{tpu_custom_call.1} parent=1 // pred_check
      _
    $region19: #{tpu_custom_call.1} parent=1 // pred_check_branch
      %53 = sbr.rel (0) target = $region21
    $region20: #{tpu_custom_call.1} parent=1 // pred_region
      %54 = dma.done [#allocation7], 896
    $region21: #{tpu_custom_call.1} parent=1 // pred_fallthru
      _
    // Predicated region
    $region22: #{tpu_custom_call.1} parent=1 // pred_check
      _
    $region23: #{tpu_custom_call.1} parent=1 // pred_check_branch
      %56 = sbr.rel (0) target = $region25
    $region24: #{tpu_custom_call.1} parent=1 // pred_region
      %57 = dma.done [#allocation7], 896
    $region25: #{tpu_custom_call.1} parent=1 // pred_fallthru
      _
    %s58 = sadd.s32 0, 0
    %s59 = sadd.s32 0, 0
    %p60 = scmp.eq.s32.totalorder 0, 0
    // Predicated region
    $region26: #{tpu_custom_call.1} parent=1 // pred_check
      %p61 = pneg %p60
    $region27: #{tpu_custom_call.1} parent=1 // pred_check_branch
      %63 = sbr.rel (%p61) target = $region29
    $region28: #{tpu_custom_call.1} parent=1 // pred_region
      %v64 = vlaneseq
      %vm65 = vcmp.ge.s32.totalorder %v64, 0
      %vm66 = vcmp.lt.s32.totalorder %v64, 896
      %vm67 = vmand %vm65, %vm66
      %68 = vst.msk [vmem:[#allocation2] sm:$0x7f] %vm67, 0.0
    $region29: #{tpu_custom_call.1} parent=1 // pred_fallthru
      _
    %v69 = vld [vmem:[#allocation6] sm:$0xff]
    %v70 = vld [vmem:[#allocation6 + $0x8] sm:$0xff]
    %v71 = vld [vmem:[#allocation6 + $0x10] sm:$0xff]
    %v72 = vld [vmem:[#allocation6 + $0x18] sm:$0xff]
    %v73 = vld [vmem:[#allocation6 + $0x20] sm:$0xff]
    %v74 = vld [vmem:[#allocation6 + $0x28] sm:$0xff]
    %v75 = vld [vmem:[#allocation6 + $0x30] sm:$0xff]
    %v76 = vld [vmem:[#allocation8] sm:$0xff]
    %v77 = vld [vmem:[#allocation8 + $0x8] sm:$0xff]
    %v78 = vld [vmem:[#allocation8 + $0x10] sm:$0xff]
    %v79 = vld [vmem:[#allocation8 + $0x18] sm:$0xff]
    %v80 = vld [vmem:[#allocation8 + $0x20] sm:$0xff]
    %v81 = vld [vmem:[#allocation8 + $0x28] sm:$0xff]
    %v82 = vld [vmem:[#allocation8 + $0x30] sm:$0xff]
    %v83 = vsub.f32 %v69, %v76
    %v84 = vsub.f32 %v70, %v77
    %v85 = vsub.f32 %v71, %v78
    %v86 = vsub.f32 %v72, %v79
    %v87 = vsub.f32 %v73, %v80
    %v88 = vsub.f32 %v74, %v81
    %v89 = vsub.f32 %v75, %v82
    %v90 = vmul.f32 %v83, %v83
    %v91 = vmul.f32 %v84, %v84
    %v92 = vmul.f32 %v85, %v85
    %v93 = vmul.f32 %v86, %v86
    %v94 = vmul.f32 %v87, %v87
    %v95 = vmul.f32 %v88, %v88
    %v96 = vmul.f32 %v89, %v89
    %v97 = vld [vmem:[#allocation2] sm:$0xff]
    %v98 = vrot.slane %v90, 4
    %v99 = vadd.f32 %v90, %v98
    %v100 = vrot.slane %v99, 2
    %v101 = vadd.f32 %v99, %v100
    %v102 = vrot.slane %v101, 1
    %v103 = vadd.f32 %v101, %v102
    %v104 = vrot.slane %v91, 4
    %v105 = vadd.f32 %v91, %v104
    %v106 = vrot.slane %v105, 2
    %v107 = vadd.f32 %v105, %v106
    %v108 = vrot.slane %v107, 1
    %v109 = vadd.f32 %v107, %v108
    %v110 = vrot.slane %v92, 4
    %v111 = vadd.f32 %v92, %v110
    %v112 = vrot.slane %v111, 2
    %v113 = vadd.f32 %v111, %v112
    %v114 = vrot.slane %v113, 1
    %v115 = vadd.f32 %v113, %v114
    %v116 = vrot.slane %v93, 4
    %v117 = vadd.f32 %v93, %v116
    %v118 = vrot.slane %v117, 2
    %v119 = vadd.f32 %v117, %v118
    %v120 = vrot.slane %v119, 1
    %v121 = vadd.f32 %v119, %v120
    %v122 = vrot.slane %v94, 4
    %v123 = vadd.f32 %v94, %v122
    %v124 = vrot.slane %v123, 2
    %v125 = vadd.f32 %v123, %v124
    %v126 = vrot.slane %v125, 1
    %v127 = vadd.f32 %v125, %v126
    %v128 = vrot.slane %v95, 4
    %v129 = vadd.f32 %v95, %v128
    %v130 = vrot.slane %v129, 2
    %v131 = vadd.f32 %v129, %v130
    %v132 = vrot.slane %v131, 1
    %v133 = vadd.f32 %v131, %v132
    %v134 = vrot.slane %v96, 4
    %v135 = vadd.f32 %v96, %v134
    %v136 = vrot.slane %v135, 2
    %v137 = vadd.f32 %v135, %v136
    %v138 = vrot.slane %v137, 1
    %v139 = vadd.f32 %v137, %v138
    %v147 = vcombine.low %v103, %v109
    %v148 = vcombine.low %v115, %v121
    %v149 = vcombine.low %v127, %v133
    %v151 = vunpack.c.l.s4 1966171168
    %v152 = vunpack.c.0.s8 %v151
    %v153 = vlaneseq
    %v154 = vshrl.u32 %v153, 7
    %v155 = vsub.s32 %v152, %v154
    %v156 = vrot.slane %v147, %v155
    %v158 = vunpack.c.l.s4 1966171168
    %v159 = vunpack.c.0.s8 %v158
    %v160 = vlaneseq
    %v161 = vshrl.u32 %v160, 7
    %v162 = vsub.s32 %v159, %v161
    %v163 = vrot.slane %v148, %v162
    %v165 = vunpack.c.l.s4 1966171168
    %v166 = vunpack.c.0.s8 %v165
    %v167 = vlaneseq
    %v168 = vshrl.u32 %v167, 7
    %v169 = vsub.s32 %v166, %v168
    %v170 = vrot.slane %v149, %v169
    %v172 = vunpack.c.l.s4 1966171168
    %v173 = vunpack.c.0.s8 %v172
    %v174 = vlaneseq
    %v175 = vshrl.u32 %v174, 7
    %v176 = vsub.s32 %v173, %v175
    %v177 = vrot.slane %v139, %v176
    %v178 = vcombine.low %v156, %v163
    %v179 = vcombine.low %v170, %v177
    %v181 = vunpack.c.l.s4 1966171168
    %v182 = vunpack.c.0.s8 %v181
    %v183 = vlaneseq
    %v184 = vshrl.u32 %v183, 7
    %v185 = vsub.s32 %v182, %v184
    %v186 = vrot.slane %v178, %v185
    %v188 = vunpack.c.l.s4 1966171168
    %v189 = vunpack.c.0.s8 %v188
    %v190 = vlaneseq
    %v191 = vshrl.u32 %v190, 7
    %v192 = vsub.s32 %v189, %v191
    %v193 = vrot.slane %v179, %v192
    %v194 = vcombine.low %v186, %v193
    %v196 = vadd.f32 %v97, %v194
    %v197 = vlaneseq
    %vm198 = vcmp.ge.s32.totalorder %v197, 0
    %vm199 = vcmp.lt.s32.totalorder %v197, 896
    %vm200 = vmand %vm198, %vm199
    %201 = vst.msk [vmem:[#allocation2] sm:$0x7f] %vm200, %v196
    // Predicated region
    $region30: #{tpu_custom_call.1} parent=1 // pred_check
      %p202 = pneg %p60
    $region31: #{tpu_custom_call.1} parent=1 // pred_check_branch
      %204 = sbr.rel (%p202) target = $region33
    $region32: #{tpu_custom_call.1} parent=1 // pred_region
      %v205 = vld [vmem:[#allocation2] sm:$0xff]
      %v206 = vld [vmem:[#allocation3] sm:$0xff]
      %v207 = vmul.f32 %v205, %v206
      %v209 = vlaneseq
      %v210 = vshrl.u32 %v209, 7
      %v211 = vsub.s32 0, %v210
      %v212 = vrot.slane %v207, %v211
      %v213 = vlaneseq
      %v214 = vshrl.u32 %v213, 7
      %v215 = vsub.s32 1, %v214
      %v216 = vrot.slane %v207, %v215
      %v217 = vlaneseq
      %v218 = vshrl.u32 %v217, 7
      %v219 = vsub.s32 2, %v218
      %v220 = vrot.slane %v207, %v219
      %v221 = vlaneseq
      %v222 = vshrl.u32 %v221, 7
      %v223 = vsub.s32 3, %v222
      %v224 = vrot.slane %v207, %v223
      %v225 = vlaneseq
      %v226 = vshrl.u32 %v225, 7
      %v227 = vsub.s32 4, %v226
      %v228 = vrot.slane %v207, %v227
      %v229 = vlaneseq
      %v230 = vshrl.u32 %v229, 7
      %v231 = vsub.s32 5, %v230
      %v232 = vrot.slane %v207, %v231
      %v233 = vlaneseq
      %v234 = vshrl.u32 %v233, 7
      %v235 = vsub.s32 6, %v234
      %v236 = vrot.slane %v207, %v235
      %vm244 = vcmask 1040384
      %v245 = vsel %vm244, %v212, 0.0
      %v246 = vsel %vm244, %v216, 0.0
      %v247 = vadd.f32 %v245, %v246
      %v248 = vsel %vm244, %v220, 0.0
      %v249 = vadd.f32 %v247, %v248
      %v250 = vsel %vm244, %v224, 0.0
      %v251 = vadd.f32 %v249, %v250
      %v252 = vsel %vm244, %v228, 0.0
      %v253 = vadd.f32 %v251, %v252
      %v254 = vsel %vm244, %v232, 0.0
      %v255 = vadd.f32 %v253, %v254
      %v256 = vsel %vm244, %v236, 0.0
      %v257 = vadd.f32 %v255, %v256
      %258 = vadd.xlane.f32.xlu0 %v257
      %v259 = vpop.xlane.xlu0 %258
      %v260 = vrot.slane %v259, 4
      %v261 = vadd.f32 %v259, %v260
      %v262 = vrot.slane %v261, 2
      %v263 = vadd.f32 %v261, %v262
      %v264 = vrot.slane %v263, 1
      %v265 = vadd.f32 %v263, %v264
      %s266 = vtos %v265
      %v267 = vstv %s266
      %268 = vst [vmem:[#allocation9] sm:$0xff] %v267
    $region33: #{tpu_custom_call.1} parent=1 // pred_fallthru
      _
    // Predicated region
    $region34: #{tpu_custom_call.1} parent=1 // pred_check
      _
    $region35: #{tpu_custom_call.1} parent=1 // pred_check_branch
      %270 = sbr.rel (0) target = $region37
    $region36: #{tpu_custom_call.1} parent=1 // pred_region
      %s272 = ssub.s32 128, 128
      %273 = vsyncadd [#allocation5], %s272
      %s275 = sshll.u32 [#allocation9], 4
      %s276 = int_to_ptr.vmem [resolvable:$true] %s275
      %278 = dma.vmem_to_hbm [thread:$0]  %s276, 128, %s3, [#allocation5]
    $region37: #{tpu_custom_call.1} parent=1 // pred_fallthru
      _
    // Predicated region
    $region38: #{tpu_custom_call.1} parent=1 // pred_check
      _
    $region39: #{tpu_custom_call.1} parent=1 // pred_check_branch
      %280 = sbr.rel (0) target = $region41
    $region40: #{tpu_custom_call.1} parent=1 // pred_region
      %281 = dma.done [#allocation5], 128
    $region41: #{tpu_custom_call.1} parent=1 // pred_fallthru
      _
    %282 = vsyncpa [#allocation4], 1
    %283 = vsyncpa [#allocation7], 1
    %284 = vsyncpa [#allocation5], 1

</llo_original>
